<compile_context>
chip_gen: v6e
topology: v6e:2x2x1
jax: 0.10.0
libtpu: 0.0.40
codegen_flags: <defaults>
</compile_context>

<pallas_src>
import jax
import jax.numpy as jnp
from jax.experimental import pallas as pl
from jax.experimental.pallas import tpu as pltpu

NEG_SLOPE = 0.01  # nn.LeakyReLU default negative_slope


def _round_up(v, m):
    return ((v + m - 1) // m) * m


def _cdiv(a, b):
    return -(-a // b)


def _leaky_relu(x):
    # single VPU max + mul (cheaper than compare+select)
    return jnp.maximum(x, NEG_SLOPE * x)


def _disc_kernel(x_ref, w1_ref, b1_ref, w2_ref, b2_ref, wd_ref, bd_ref, dsc_ref):
    """One batch tile: 3 MXU matmuls (w3·wd pre-fused) + LeakyReLUs, f32 accumulation."""
    cdt = w1_ref.dtype  # matmul operand dtype (f32 or bf16); biases stay f32

    x = x_ref[...].astype(cdt)
    h = jnp.dot(x, w1_ref[...], preferred_element_type=jnp.float32) + b1_ref[...]
    h = _leaky_relu(h)
    h = jnp.dot(h.astype(cdt), w2_ref[...], preferred_element_type=jnp.float32) + b2_ref[...]
    h = _leaky_relu(h)
    # fused (w3 @ wd) head: no nonlinearity between w3 and wd in the original module
    d = jnp.dot(h.astype(cdt), wd_ref[...], preferred_element_type=jnp.float32) + bd_ref[...]
    dsc_ref[...] = _leaky_relu(d).astype(dsc_ref.dtype)


def _vmem_capacity_bytes():
    try:
        return int(pltpu.get_tpu_info().vmem_capacity_bytes)
    except Exception:
        return 64 << 20  # conservative: v7x per-TC VMEM


def _vmem_footprint(tb, d, out_pad, w_itemsize, weight_bufs):
    """Approximate VMEM footprint: resident weights, pipelined x/dsc, activations."""
    weights = (4 * d * d + 8 * d * d + 2 * d * out_pad) * w_itemsize * weight_bufs
    biases = (6 * d + out_pad) * 4 * weight_bufs
    io = (tb * d + tb * out_pad) * 4 * 2                     # double-buffered x / dsc
    acts = tb * (6 * d + out_pad) * 4 + tb * 6 * d * w_itemsize
    return weights + biases + io + acts


def _choose_batch_tile(batch, block_rows, d, out_pad, w_itemsize, budget):
    """Balanced, sublane-aligned batch tile; >=2 programs when batch allows (v7x)."""
    n_prog = max(1, _cdiv(batch, block_rows))
    if n_prog == 1 and batch >= 16:
        n_prog = 2  # keep both v7x TensorCores busy / enable x-dsc pipelining
    tb = _round_up(_cdiv(batch, n_prog), 8)
    # shrink tile until the (pessimistic, double-buffered-weight) footprint fits
    while tb > 8 and _vmem_footprint(tb, d, out_pad, w_itemsize, weight_bufs=2) > budget:
        tb = _round_up(tb // 2, 8)
    return tb


def _build_pallas_call(tb, d, out_pad, padded_batch, vmem_limit, weight_pipeline_mode):
    def const_spec(shape):
        if weight_pipeline_mode is not None:
            return pl.BlockSpec(shape, lambda i: (0, 0), pipeline_mode=weight_pipeline_mode)
        return pl.BlockSpec(shape, lambda i: (0, 0))

    grid = (padded_batch // tb,)
    return pl.pallas_call(
        _disc_kernel,
        out_shape=jax.ShapeDtypeStruct((padded_batch, out_pad), jnp.float32),
        grid_spec=pltpu.PrefetchScalarGridSpec(
            num_scalar_prefetch=0,
            grid=grid,
            in_specs=[
                pl.BlockSpec((tb, d), lambda i: (i, 0)),        # x  (pipelined)
                const_spec((d, 4 * d)),                         # w1 (resident)
                const_spec((1, 4 * d)),                         # b1
                const_spec((4 * d, 2 * d)),                     # w2
                const_spec((1, 2 * d)),                         # b2
                const_spec((2 * d, out_pad)),                   # wd_fused (= w3 @ wd, padded)
                const_spec((1, out_pad)),                       # bd_fused (= b3 @ wd + bd, padded)
            ],
            out_specs=pl.BlockSpec((tb, out_pad), lambda i: (i, 0)),
        ),
        compiler_params=pltpu.CompilerParams(
            dimension_semantics=("parallel",),   # shard batch axis across TCs (v7x)
            vmem_limit_bytes=vmem_limit,
        ),
    )


def discriminator_single_to_multi_forward(x, params, targets_len,
                                          block_rows=None, use_bf16=True):
    """Runs the Pallas kernel and splits the dsc head by targets_len."""
    batch, d = x.shape
    out_size = params["wd"].shape[1]
    out_pad = _round_up(out_size, 128)            # lane-dense output slab

    cap = _vmem_capacity_bytes()
    if block_rows is None:
        block_rows = 1024 if cap >= (100 << 20) else 512   # v5e/v6e vs v7x

    w_dtype = jnp.bfloat16 if use_bf16 else jnp.float32
    w_itemsize = jnp.dtype(w_dtype).itemsize

    # --- batch tiling ---------------------------------------------------------
    tb = _choose_batch_tile(batch, block_rows, d, out_pad, w_itemsize, cap - (8 << 20))
    padded_batch = _round_up(batch, tb)
    xp = x if padded_batch == batch else jnp.pad(x, ((0, padded_batch - batch), (0, 0)))

    # --- weight prep: pad dsc head, fuse w3·wd (f32), optional bf16 operands ---
    wd_pad = jnp.pad(params["wd"], ((0, 0), (0, out_pad - out_size)))
    bd_pad = jnp.pad(params["bd"], ((0, 0), (0, out_pad - out_size)))
    wd_fused = (params["w3"] @ wd_pad).astype(w_dtype)             # (2d, out_pad)
    bd_fused = (params["b3"] @ wd_pad + bd_pad).astype(jnp.float32)  # (1, out_pad)
    w1 = params["w1"].astype(w_dtype)
    w2 = params["w2"].astype(w_dtype)
    b1 = params["b1"].astype(jnp.float32)
    b2 = params["b2"].astype(jnp.float32)

    # --- VMEM budget (pessimistic: weights double-buffered), capped below HW ---
    foot = _vmem_footprint(tb, d, out_pad, w_itemsize, weight_bufs=2)
    vmem_limit = int(min(max(foot + (4 << 20), 32 << 20), cap - (4 << 20)))

    args = (xp, w1, b1, w2, b2, wd_fused, bd_fused)
    try:
        # invariant weight/bias blocks single-buffered (halves resident-weight VMEM)
        dsc = _build_pallas_call(tb, d, out_pad, padded_batch, vmem_limit,
                                 weight_pipeline_mode=pl.Buffered(1))(*args)
    except Exception:
        # fallback for JAX versions / configs that reject pipeline_mode=Buffered(1)
        dsc = _build_pallas_call(tb, d, out_pad, padded_batch, vmem_limit,
                                 weight_pipeline_mode=None)(*args)

    # slice each target directly from the padded slab (no intermediate copy)
    outputs = []
    start = 0
    for n in targets_len:
        outputs.append(dsc[:batch, start:start + n])
        start += n
    return tuple(outputs)


def init_params(key, input_size, output_size):
    """Deterministic nn.Linear-style init: U(-1/sqrt(fan_in), 1/sqrt(fan_in))."""
    def linear(k, fan_in, fan_out):
        kw, kb = jax.random.split(k)
        bound = 1.0 / jnp.sqrt(float(fan_in))
        w = jax.random.uniform(kw, (fan_in, fan_out), jnp.float32, -bound, bound)
        b = jax.random.uniform(kb, (1, fan_out), jnp.float32, -bound, bound)
        return w, b

    keys = jax.random.split(key, 4)
    d = input_size
    w1, b1 = linear(keys[0], d, 4 * d)
    w2, b2 = linear(keys[1], 4 * d, 2 * d)
    w3, b3 = linear(keys[2], 2 * d, d)
    wd, bd = linear(keys[3], d, output_size)   # dsc head
    # (clf head params are never observable from this module's forward; omitted)
    return dict(w1=w1, b1=b1, w2=w2, b2=b2, w3=w3, b3=b3, wd=wd, bd=bd)


def _reference_forward(x, params, targets_len):
    """Pure-JAX reference (f32, un-fused) for correctness checking."""
    lr = lambda v: jnp.where(v > 0, v, NEG_SLOPE * v)
    h = lr(x @ params["w1"] + params["b1"])
    h = lr(h @ params["w2"] + params["b2"])
    common = h @ params["w3"] + params["b3"]
    dsc = lr(common @ params["wd"] + params["bd"])
    outs, start = [], 0
    for n in targets_len:
        outs.append(dsc[:, start:start + n])
        start += n
    return tuple(outs)


if __name__ == "__main__":
    key = jax.random.PRNGKey(0)
    k_params, k_x, k_x2 = jax.random.split(key, 3)

    targets_len = (2, 3)
    input_size = 32
    output_size = sum(targets_len)   # 5
    batch = 8

    params = init_params(k_params, input_size, output_size)
    x = jax.random.normal(k_x, (batch, input_size), jnp.float32)

    # default bf16-operand / f32-accumulation path
    outs = discriminator_single_to_multi_forward(x, params, targets_len)
    outs = jax.block_until_ready(outs)
    refs = _reference_forward(x, params, targets_len)
    assert len(outs) == len(targets_len)
    for o, r, n in zip(outs, refs, targets_len):
        assert o.shape == (batch, n), o.shape
        assert jnp.allclose(o, r, atol=3e-2, rtol=3e-2), "bf16 kernel/reference mismatch"

    # strict f32 path
    outs32 = discriminator_single_to_multi_forward(x, params, targets_len, use_bf16=False)
    outs32 = jax.block_until_ready(outs32)
    for o, r in zip(outs32, refs):
        assert jnp.allclose(o, r, atol=1e-4, rtol=1e-4), "f32 kernel/reference mismatch"

    # multi-tile / padded-batch path (grid >= 2 programs)
    batch2 = 40
    x2 = jax.random.normal(k_x2, (batch2, input_size), jnp.float32)
    outs2 = discriminator_single_to_multi_forward(x2, params, targets_len)
    outs2 = jax.block_until_ready(outs2)
    refs2 = _reference_forward(x2, params, targets_len)
    for o, r, n in zip(outs2, refs2, targets_len):
        assert o.shape == (batch2, n), o.shape
        assert jnp.allclose(o, r, atol=3e-2, rtol=3e-2), "tiled kernel/reference mismatch"

    print("KERNEL_OK")
</pallas_src>

<mosaic_0001>
module attributes {stable_mosaic.version = 11 : i64} {
  func.func @_disc_kernel(%arg0: i32, %arg1: memref<8x32xf32, #tpu.memory_space<vmem>>, %arg2: memref<32x128xbf16, #tpu.memory_space<vmem>>, %arg3: memref<1x128xf32, #tpu.memory_space<vmem>>, %arg4: memref<128x64xbf16, #tpu.memory_space<vmem>>, %arg5: memref<1x64xf32, #tpu.memory_space<vmem>>, %arg6: memref<64x128xbf16, #tpu.memory_space<vmem>>, %arg7: memref<1x128xf32, #tpu.memory_space<vmem>>, %arg8: memref<8x128xf32, #tpu.memory_space<vmem>>) attributes {dimension_semantics = [#tpu.dimension_semantics<parallel>], iteration_bounds = array<i64: 1>, scalar_prefetch = 0 : i64, scratch_operands = 0 : i64, tpu.core_type = #tpu.core_type<tc>, window_params = [{transform_indices = @transform_0, window_bounds = array<i64: 8, 32>}, {pipeline_mode = #tpu.pipeline_mode<synchronous>, transform_indices = @transform_1, window_bounds = array<i64: 32, 128>}, {pipeline_mode = #tpu.pipeline_mode<synchronous>, transform_indices = @transform_2, window_bounds = array<i64: 1, 128>}, {pipeline_mode = #tpu.pipeline_mode<synchronous>, transform_indices = @transform_3, window_bounds = array<i64: 128, 64>}, {pipeline_mode = #tpu.pipeline_mode<synchronous>, transform_indices = @transform_4, window_bounds = array<i64: 1, 64>}, {pipeline_mode = #tpu.pipeline_mode<synchronous>, transform_indices = @transform_5, window_bounds = array<i64: 64, 128>}, {pipeline_mode = #tpu.pipeline_mode<synchronous>, transform_indices = @transform_6, window_bounds = array<i64: 1, 128>}, {transform_indices = @transform_7, window_bounds = array<i64: 8, 128>}]} {
    %c0 = arith.constant 0 : index
    %c0_0 = arith.constant 0 : index
    %0 = vector.load %arg1[%c0, %c0_0] : memref<8x32xf32, #tpu.memory_space<vmem>>, vector<8x32xf32>
    %1 = arith.truncf %0 : vector<8x32xf32> to vector<8x32xbf16>
    %c0_1 = arith.constant 0 : index
    %c0_2 = arith.constant 0 : index
    %2 = vector.load %arg2[%c0_1, %c0_2] : memref<32x128xbf16, #tpu.memory_space<vmem>>, vector<32x128xbf16>
    %cst = arith.constant dense<0.000000e+00> : vector<8x128xf32>
    %3 = tpu.matmul %1, %2, %cst {dimension_numbers = #tpu.dot_dimension_numbers<[1], [0], [0], [1], [0, 0, 1, 1], [], []>} : vector<8x32xbf16>, vector<32x128xbf16>, vector<8x128xf32> -> vector<8x128xf32>
    %c0_3 = arith.constant 0 : index
    %c0_4 = arith.constant 0 : index
    %4 = vector.load %arg3[%c0_3, %c0_4] : memref<1x128xf32, #tpu.memory_space<vmem>>, vector<1x128xf32>
    %5 = vector.broadcast %4 : vector<1x128xf32> to vector<8x128xf32>
    %6 = arith.addf %3, %5 : vector<8x128xf32>
    %cst_5 = arith.constant 0.00999999977 : f32
    %7 = vector.broadcast %cst_5 : f32 to vector<8x128xf32>
    %8 = arith.mulf %7, %6 : vector<8x128xf32>
    %9 = arith.maximumf %6, %8 : vector<8x128xf32>
    %10 = arith.truncf %9 : vector<8x128xf32> to vector<8x128xbf16>
    %c0_6 = arith.constant 0 : index
    %c0_7 = arith.constant 0 : index
    %11 = vector.load %arg4[%c0_6, %c0_7] : memref<128x64xbf16, #tpu.memory_space<vmem>>, vector<128x64xbf16>
    %cst_8 = arith.constant dense<0.000000e+00> : vector<8x64xf32>
    %12 = tpu.matmul %10, %11, %cst_8 {dimension_numbers = #tpu.dot_dimension_numbers<[1], [0], [0], [1], [0, 0, 1, 1], [], []>} : vector<8x128xbf16>, vector<128x64xbf16>, vector<8x64xf32> -> vector<8x64xf32>
    %c0_9 = arith.constant 0 : index
    %c0_10 = arith.constant 0 : index
    %13 = vector.load %arg5[%c0_9, %c0_10] : memref<1x64xf32, #tpu.memory_space<vmem>>, vector<1x64xf32>
    %14 = vector.broadcast %13 : vector<1x64xf32> to vector<8x64xf32>
    %15 = arith.addf %12, %14 : vector<8x64xf32>
    %cst_11 = arith.constant 0.00999999977 : f32
    %16 = vector.broadcast %cst_11 : f32 to vector<8x64xf32>
    %17 = arith.mulf %16, %15 : vector<8x64xf32>
    %18 = arith.maximumf %15, %17 : vector<8x64xf32>
    %19 = arith.truncf %18 : vector<8x64xf32> to vector<8x64xbf16>
    %c0_12 = arith.constant 0 : index
    %c0_13 = arith.constant 0 : index
    %20 = vector.load %arg6[%c0_12, %c0_13] : memref<64x128xbf16, #tpu.memory_space<vmem>>, vector<64x128xbf16>
    %cst_14 = arith.constant dense<0.000000e+00> : vector<8x128xf32>
    %21 = tpu.matmul %19, %20, %cst_14 {dimension_numbers = #tpu.dot_dimension_numbers<[1], [0], [0], [1], [0, 0, 1, 1], [], []>} : vector<8x64xbf16>, vector<64x128xbf16>, vector<8x128xf32> -> vector<8x128xf32>
    %c0_15 = arith.constant 0 : index
    %c0_16 = arith.constant 0 : index
    %22 = vector.load %arg7[%c0_15, %c0_16] : memref<1x128xf32, #tpu.memory_space<vmem>>, vector<1x128xf32>
    %23 = vector.broadcast %22 : vector<1x128xf32> to vector<8x128xf32>
    %24 = arith.addf %21, %23 : vector<8x128xf32>
    %cst_17 = arith.constant 0.00999999977 : f32
    %25 = vector.broadcast %cst_17 : f32 to vector<8x128xf32>
    %26 = arith.mulf %25, %24 : vector<8x128xf32>
    %27 = arith.maximumf %24, %26 : vector<8x128xf32>
    %c0_18 = arith.constant 0 : index
    %c0_19 = arith.constant 0 : index
    %28 = vector.load %arg8[%c0_18, %c0_19] : memref<8x128xf32, #tpu.memory_space<vmem>>, vector<8x128xf32>
    tpu.vector_store %arg8[%c0_18, %c0_19], %27 {strides = array<i32>} : memref<8x128xf32, #tpu.memory_space<vmem>>, vector<8x128xf32>,
    return
  }
  func.func @transform_0(%arg0: i32) -> (i32, i32) {
    %c0_i32 = arith.constant 0 : i32
    %c0_i32_0 = arith.constant 0 : i32
    return %arg0, %c0_i32 : i32, i32
  }
  func.func @transform_1(%arg0: i32) -> (i32, i32) {
    %c0_i32 = arith.constant 0 : i32
    %c0_i32_0 = arith.constant 0 : i32
    %c0_i32_1 = arith.constant 0 : i32
    return %c0_i32, %c0_i32_0 : i32, i32
  }
  func.func @transform_2(%arg0: i32) -> (i32, i32) {
    %c0_i32 = arith.constant 0 : i32
    %c0_i32_0 = arith.constant 0 : i32
    %c0_i32_1 = arith.constant 0 : i32
    return %c0_i32, %c0_i32_0 : i32, i32
  }
  func.func @transform_3(%arg0: i32) -> (i32, i32) {
    %c0_i32 = arith.constant 0 : i32
    %c0_i32_0 = arith.constant 0 : i32
    %c0_i32_1 = arith.constant 0 : i32
    return %c0_i32, %c0_i32_0 : i32, i32
  }
  func.func @transform_4(%arg0: i32) -> (i32, i32) {
    %c0_i32 = arith.constant 0 : i32
    %c0_i32_0 = arith.constant 0 : i32
    %c0_i32_1 = arith.constant 0 : i32
    return %c0_i32, %c0_i32_0 : i32, i32
  }
  func.func @transform_5(%arg0: i32) -> (i32, i32) {
    %c0_i32 = arith.constant 0 : i32
    %c0_i32_0 = arith.constant 0 : i32
    %c0_i32_1 = arith.constant 0 : i32
    return %c0_i32, %c0_i32_0 : i32, i32
  }
  func.func @transform_6(%arg0: i32) -> (i32, i32) {
    %c0_i32 = arith.constant 0 : i32
    %c0_i32_0 = arith.constant 0 : i32
    %c0_i32_1 = arith.constant 0 : i32
    return %c0_i32, %c0_i32_0 : i32, i32
  }
  func.func @transform_7(%arg0: i32) -> (i32, i32) {
    %c0_i32 = arith.constant 0 : i32
    %c0_i32_0 = arith.constant 0 : i32
    return %arg0, %c0_i32 : i32, i32
  }
}

module attributes {stable_mosaic.version = 11 : i64} {
  func.func @_disc_kernel(%arg0: i32, %arg1: memref<8x32xf32, #tpu.memory_space<vmem>>, %arg2: memref<32x128xbf16, #tpu.memory_space<vmem>>, %arg3: memref<1x128xf32, #tpu.memory_space<vmem>>, %arg4: memref<128x64xbf16, #tpu.memory_space<vmem>>, %arg5: memref<1x64xf32, #tpu.memory_space<vmem>>, %arg6: memref<64x128xbf16, #tpu.memory_space<vmem>>, %arg7: memref<1x128xf32, #tpu.memory_space<vmem>>, %arg8: memref<8x128xf32, #tpu.memory_space<vmem>>) attributes {dimension_semantics = [#tpu.dimension_semantics<parallel>], iteration_bounds = array<i64: 1>, scalar_prefetch = 0 : i64, scratch_operands = 0 : i64, tpu.core_type = #tpu.core_type<tc>, window_params = [{transform_indices = @transform_0, window_bounds = array<i64: 8, 32>}, {pipeline_mode = #tpu.pipeline_mode<synchronous>, transform_indices = @transform_1, window_bounds = array<i64: 32, 128>}, {pipeline_mode = #tpu.pipeline_mode<synchronous>, transform_indices = @transform_2, window_bounds = array<i64: 1, 128>}, {pipeline_mode = #tpu.pipeline_mode<synchronous>, transform_indices = @transform_3, window_bounds = array<i64: 128, 64>}, {pipeline_mode = #tpu.pipeline_mode<synchronous>, transform_indices = @transform_4, window_bounds = array<i64: 1, 64>}, {pipeline_mode = #tpu.pipeline_mode<synchronous>, transform_indices = @transform_5, window_bounds = array<i64: 64, 128>}, {pipeline_mode = #tpu.pipeline_mode<synchronous>, transform_indices = @transform_6, window_bounds = array<i64: 1, 128>}, {transform_indices = @transform_7, window_bounds = array<i64: 8, 128>}]} {
    %c0 = arith.constant 0 : index
    %c0_0 = arith.constant 0 : index
    %0 = vector.load %arg1[%c0, %c0_0] : memref<8x32xf32, #tpu.memory_space<vmem>>, vector<8x32xf32>
    %1 = arith.truncf %0 : vector<8x32xf32> to vector<8x32xbf16>
    %c0_1 = arith.constant 0 : index
    %c0_2 = arith.constant 0 : index
    %2 = vector.load %arg2[%c0_1, %c0_2] : memref<32x128xbf16, #tpu.memory_space<vmem>>, vector<32x128xbf16>
    %cst = arith.constant dense<0.000000e+00> : vector<8x128xf32>
    %3 = tpu.matmul %1, %2, %cst {dimension_numbers = #tpu.dot_dimension_numbers<[1], [0], [0], [1], [0, 0, 1, 1], [], []>} : vector<8x32xbf16>, vector<32x128xbf16>, vector<8x128xf32> -> vector<8x128xf32>
    %c0_3 = arith.constant 0 : index
    %c0_4 = arith.constant 0 : index
    %4 = vector.load %arg3[%c0_3, %c0_4] : memref<1x128xf32, #tpu.memory_space<vmem>>, vector<1x128xf32>
    %5 = vector.broadcast %4 : vector<1x128xf32> to vector<8x128xf32>
    %6 = arith.addf %3, %5 : vector<8x128xf32>
    %cst_5 = arith.constant 0.00999999977 : f32
    %7 = vector.broadcast %cst_5 : f32 to vector<8x128xf32>
    %8 = arith.mulf %7, %6 : vector<8x128xf32>
    %9 = arith.maximumf %6, %8 : vector<8x128xf32>
    %10 = arith.truncf %9 : vector<8x128xf32> to vector<8x128xbf16>
    %c0_6 = arith.constant 0 : index
    %c0_7 = arith.constant 0 : index
    %11 = vector.load %arg4[%c0_6, %c0_7] : memref<128x64xbf16, #tpu.memory_space<vmem>>, vector<128x64xbf16>
    %cst_8 = arith.constant dense<0.000000e+00> : vector<8x64xf32>
    %12 = tpu.matmul %10, %11, %cst_8 {dimension_numbers = #tpu.dot_dimension_numbers<[1], [0], [0], [1], [0, 0, 1, 1], [], []>} : vector<8x128xbf16>, vector<128x64xbf16>, vector<8x64xf32> -> vector<8x64xf32>
    %c0_9 = arith.constant 0 : index
    %c0_10 = arith.constant 0 : index
    %13 = vector.load %arg5[%c0_9, %c0_10] : memref<1x64xf32, #tpu.memory_space<vmem>>, vector<1x64xf32>
    %14 = vector.broadcast %13 : vector<1x64xf32> to vector<8x64xf32>
    %15 = arith.addf %12, %14 : vector<8x64xf32>
    %cst_11 = arith.constant 0.00999999977 : f32
    %16 = vector.broadcast %cst_11 : f32 to vector<8x64xf32>
    %17 = arith.mulf %16, %15 : vector<8x64xf32>
    %18 = arith.maximumf %15, %17 : vector<8x64xf32>
    %19 = arith.truncf %18 : vector<8x64xf32> to vector<8x64xbf16>
    %c0_12 = arith.constant 0 : index
    %c0_13 = arith.constant 0 : index
    %20 = vector.load %arg6[%c0_12, %c0_13] : memref<64x128xbf16, #tpu.memory_space<vmem>>, vector<64x128xbf16>
    %cst_14 = arith.constant dense<0.000000e+00> : vector<8x128xf32>
    %21 = tpu.matmul %19, %20, %cst_14 {dimension_numbers = #tpu.dot_dimension_numbers<[1], [0], [0], [1], [0, 0, 1, 1], [], []>} : vector<8x64xbf16>, vector<64x128xbf16>, vector<8x128xf32> -> vector<8x128xf32>
    %c0_15 = arith.constant 0 : index
    %c0_16 = arith.constant 0 : index
    %22 = vector.load %arg7[%c0_15, %c0_16] : memref<1x128xf32, #tpu.memory_space<vmem>>, vector<1x128xf32>
    %23 = vector.broadcast %22 : vector<1x128xf32> to vector<8x128xf32>
    %24 = arith.addf %21, %23 : vector<8x128xf32>
    %cst_17 = arith.constant 0.00999999977 : f32
    %25 = vector.broadcast %cst_17 : f32 to vector<8x128xf32>
    %26 = arith.mulf %25, %24 : vector<8x128xf32>
    %27 = arith.maximumf %24, %26 : vector<8x128xf32>
    %c0_18 = arith.constant 0 : index
    %c0_19 = arith.constant 0 : index
    %28 = vector.load %arg8[%c0_18, %c0_19] : memref<8x128xf32, #tpu.memory_space<vmem>>, vector<8x128xf32>
    tpu.vector_store %arg8[%c0_18, %c0_19], %27 {strides = array<i32>} : memref<8x128xf32, #tpu.memory_space<vmem>>, vector<8x128xf32>,
    return
  }
  func.func @transform_0(%arg0: i32) -> (i32, i32) {
    %c0_i32 = arith.constant 0 : i32
    %c0_i32_0 = arith.constant 0 : i32
    return %arg0, %c0_i32 : i32, i32
  }
  func.func @transform_1(%arg0: i32) -> (i32, i32) {
    %c0_i32 = arith.constant 0 : i32
    %c0_i32_0 = arith.constant 0 : i32
    %c0_i32_1 = arith.constant 0 : i32
    return %c0_i32, %c0_i32_0 : i32, i32
  }
  func.func @transform_2(%arg0: i32) -> (i32, i32) {
    %c0_i32 = arith.constant 0 : i32
    %c0_i32_0 = arith.constant 0 : i32
    %c0_i32_1 = arith.constant 0 : i32
    return %c0_i32, %c0_i32_0 : i32, i32
  }
  func.func @transform_3(%arg0: i32) -> (i32, i32) {
    %c0_i32 = arith.constant 0 : i32
    %c0_i32_0 = arith.constant 0 : i32
    %c0_i32_1 = arith.constant 0 : i32
    return %c0_i32, %c0_i32_0 : i32, i32
  }
  func.func @transform_4(%arg0: i32) -> (i32, i32) {
    %c0_i32 = arith.constant 0 : i32
    %c0_i32_0 = arith.constant 0 : i32
    %c0_i32_1 = arith.constant 0 : i32
    return %c0_i32, %c0_i32_0 : i32, i32
  }
  func.func @transform_5(%arg0: i32) -> (i32, i32) {
    %c0_i32 = arith.constant 0 : i32
    %c0_i32_0 = arith.constant 0 : i32
    %c0_i32_1 = arith.constant 0 : i32
    return %c0_i32, %c0_i32_0 : i32, i32
  }
  func.func @transform_6(%arg0: i32) -> (i32, i32) {
    %c0_i32 = arith.constant 0 : i32
    %c0_i32_0 = arith.constant 0 : i32
    %c0_i32_1 = arith.constant 0 : i32
    return %c0_i32, %c0_i32_0 : i32, i32
  }
  func.func @transform_7(%arg0: i32) -> (i32, i32) {
    %c0_i32 = arith.constant 0 : i32
    %c0_i32_0 = arith.constant 0 : i32
    return %arg0, %c0_i32 : i32, i32
  }
}

</mosaic_0001>

<llo_original>
// kernel: tpu_custom_call.1
$region0: #{tpu_custom_call.1}
  #allocation0 [shape = 'u32[]', space=smem, size = 0x4, offset = 0x4, fixed_abs, tag = 'smem constant byte address 0x4 - core index']
  #allocation1 [shape = 'u32[144,128]{1,0:T(1,128)}', space=vmem, size = 0x12000, scoped, tag = 'internal scratch']
  %s0 = inlined_call_operand.vmem [shape: f32[8,32], index: 0, kind: input, shape index: {}]
  %s1 = inlined_call_operand.vmem [shape: bf16[32,128], index: 1, kind: input, shape index: {}]
  %s2 = inlined_call_operand.vmem [shape: f32[1,128], index: 2, kind: input, shape index: {}]
  %s3 = inlined_call_operand.vmem [shape: bf16[128,64], index: 3, kind: input, shape index: {}]
  %s4 = inlined_call_operand.vmem [shape: f32[1,64], index: 4, kind: input, shape index: {}]
  %s5 = inlined_call_operand.vmem [shape: bf16[64,128], index: 5, kind: input, shape index: {}]
  %s6 = inlined_call_operand.vmem [shape: f32[1,128], index: 6, kind: input, shape index: {}]
  %s7 = inlined_call_operand.hbm [shape: f32[8,128], index: 7, kind: output, shape index: {}]
  %s8 = sld [smem:[#allocation0]]
  $region38: #{tpu_custom_call.1} parent=0
    _
  %s10 = ssub.s32 1, %s8
  %s11 = scalar_select 0, %s10, %s8
  $region1: #{tpu_custom_call.1} parent=0
    #allocation2 [shape = 'u8[4096]{0}', space=vmem, size = 0x1000, scoped, tag = 'output window, operand 0, single buffered']
    #allocation3 [shape = 's32[1]{0}', space=sflag, size = 0x4, scoped, tag = 'scoped memory for tpu_custom_call.1']
    %12 = vsyncpa [#allocation3], 0
    // Predicated region
    $region2: #{tpu_custom_call.1} parent=1 // pred_check
      _
    $region3: #{tpu_custom_call.1} parent=1 // pred_check_branch
      %14 = sbr.rel (0) target = $region5
    $region4: #{tpu_custom_call.1} parent=1 // pred_region
      _
    $region5: #{tpu_custom_call.1} parent=1 // pred_fallthru
      _
    // Predicated region
    $region6: #{tpu_custom_call.1} parent=1 // pred_check
      _
    $region7: #{tpu_custom_call.1} parent=1 // pred_check_branch
      %16 = sbr.rel (0) target = $region9
    $region8: #{tpu_custom_call.1} parent=1 // pred_region
      _
    $region9: #{tpu_custom_call.1} parent=1 // pred_fallthru
      _
    // Predicated region
    $region10: #{tpu_custom_call.1} parent=1 // pred_check
      _
    $region11: #{tpu_custom_call.1} parent=1 // pred_check_branch
      %18 = sbr.rel (0) target = $region13
    $region12: #{tpu_custom_call.1} parent=1 // pred_region
      _
    $region13: #{tpu_custom_call.1} parent=1 // pred_fallthru
      _
    // Predicated region
    $region14: #{tpu_custom_call.1} parent=1 // pred_check
      _
    $region15: #{tpu_custom_call.1} parent=1 // pred_check_branch
      %20 = sbr.rel (0) target = $region17
    $region16: #{tpu_custom_call.1} parent=1 // pred_region
      _
    $region17: #{tpu_custom_call.1} parent=1 // pred_fallthru
      _
    // Predicated region
    $region18: #{tpu_custom_call.1} parent=1 // pred_check
      _
    $region19: #{tpu_custom_call.1} parent=1 // pred_check_branch
      %22 = sbr.rel (0) target = $region21
    $region20: #{tpu_custom_call.1} parent=1 // pred_region
      _
    $region21: #{tpu_custom_call.1} parent=1 // pred_fallthru
      _
    // Predicated region
    $region22: #{tpu_custom_call.1} parent=1 // pred_check
      _
    $region23: #{tpu_custom_call.1} parent=1 // pred_check_branch
      %24 = sbr.rel (0) target = $region25
    $region24: #{tpu_custom_call.1} parent=1 // pred_region
      _
    $region25: #{tpu_custom_call.1} parent=1 // pred_fallthru
      _
    // Predicated region
    $region26: #{tpu_custom_call.1} parent=1 // pred_check
      _
    $region27: #{tpu_custom_call.1} parent=1 // pred_check_branch
      %26 = sbr.rel (0) target = $region29
    $region28: #{tpu_custom_call.1} parent=1 // pred_region
      _
    $region29: #{tpu_custom_call.1} parent=1 // pred_fallthru
      _
    %v28 = vld [vmem:[%s0] sm:$0xff]
    %v29 = vpack.c.bf16 %v28, %v28
    %v30 = vld [vmem:[%s1] sm:$0xf]
    %v31 = vld [vmem:[%s1 + $0x4] sm:$0xf]
    %v32 = vld [vmem:[%s1 + $0x8] sm:$0xf]
    %v33 = vld [vmem:[%s1 + $0xc] sm:$0xf]
    %v34 = vld [vmem:[%s2] sm:$0x1]
    %v36 = vlaneseq
    %v37 = vshrl.u32 %v36, 7
    %v38 = vsub.s32 0, %v37
    %v39 = vrot.slane %v34, %v38
    %v45 = vunpack.c.l.b16 %v30
    %v46 = vunpack.c.l.b16 %v31
    %v47 = vunpack.c.l.b16 %v32
    %v48 = vunpack.c.l.b16 %v33
    %v49 = vpack.c.b16 %v46, %v45
    %v50 = vpack.c.b16 %v48, %v47
    %vm53 = vcmask 261120
    %v55 = vsel %vm53, %v29, 0
    %57 = vmatprep.subr.bf16.mxu0 0
    %58 = vmatpush1.bf16.msra.mxu0 0
    %59 = vmatprep.subr.bf16.mxu0 0
    %60 = vmatpush1.bf16.msra.mxu0 0
    %61 = vmatprep.subr.bf16.mxu0 0
    %62 = vmatpush1.bf16.msra.mxu0 0
    %63 = vmatprep.subr.bf16.mxu0 0
    %64 = vmatpush1.bf16.msra.mxu0 0
    %65 = vmatprep.subr.bf16.mxu0 0
    %66 = vmatpush1.bf16.msra.mxu0 0
    %67 = vmatprep.subr.bf16.mxu0 0
    %68 = vmatpush1.bf16.msra.mxu0 0
    %69 = vmatprep.subr.bf16.mxu0 0
    %70 = vmatpush1.bf16.msra.mxu0 %v50
    %71 = vmatprep.subr.bf16.mxu0 0
    %72 = vmatpush1.bf16.msra.mxu0 %v49
    %73 = vmatprep.subr.bf16.mxu0 0
    %74 = vmatpush2.bf16.msra.mxu0 0
    %75 = vmatprep.subr.bf16.mxu0 0
    %76 = vmatpush2.bf16.msra.mxu0 0
    %77 = vmatprep.subr.bf16.mxu0 0
    %78 = vmatpush2.bf16.msra.mxu0 0
    %79 = vmatprep.subr.bf16.mxu0 0
    %80 = vmatpush2.bf16.msra.mxu0 0
    %81 = vmatprep.subr.bf16.mxu0 0
    %82 = vmatpush2.bf16.msra.mxu0 0
    %83 = vmatprep.subr.bf16.mxu0 0
    %84 = vmatpush2.bf16.msra.mxu0 0
    %85 = vmatprep.subr.bf16.mxu0 0
    %86 = vmatpush2.bf16.msra.mxu0 0
    %87 = vmatprep.subr.bf16.mxu0 0
    %88 = vmatpush2.bf16.msra.mxu0 0
    %89 = vmatprep.mubr.bf16.mxu0 0
    %90 = vmatmul.mubr.bf16.gmra.mxu0 %v55
    %v91 = vpop.f32.mrf.mxu0
    %v92 = vadd.f32 %v39, %v91
    %v93 = vpop.f32.mrf.mxu0
    %v94 = vpop.f32.mrf.mxu0
    %v95 = vpop.f32.mrf.mxu0
    %96 = vdwg.mxu0
    %v97 = vmul.f32 %v92, 0.01
    %v98 = vmax.f32 %v92, %v97
    %v99 = vpack.c.bf16 %v98, %v98
    %v100 = vld [vmem:[%s3] sm:$0xf]
    %v101 = vld [vmem:[%s3 + $0x4] sm:$0xf]
    %v102 = vld [vmem:[%s3 + $0x8] sm:$0xf]
    %v103 = vld [vmem:[%s3 + $0xc] sm:$0xf]
    %v104 = vld [vmem:[%s3 + $0x10] sm:$0xf]
    %v105 = vld [vmem:[%s3 + $0x14] sm:$0xf]
    %v106 = vld [vmem:[%s3 + $0x18] sm:$0xf]
    %v107 = vld [vmem:[%s3 + $0x1c] sm:$0xf]
    %v108 = vld [vmem:[%s3 + $0x20] sm:$0xf]
    %v109 = vld [vmem:[%s3 + $0x24] sm:$0xf]
    %v110 = vld [vmem:[%s3 + $0x28] sm:$0xf]
    %v111 = vld [vmem:[%s3 + $0x2c] sm:$0xf]
    %v112 = vld [vmem:[%s3 + $0x30] sm:$0xf]
    %v113 = vld [vmem:[%s3 + $0x34] sm:$0xf]
    %v114 = vld [vmem:[%s3 + $0x38] sm:$0xf]
    %v115 = vld [vmem:[%s3 + $0x3c] sm:$0xf]
    %v116 = vld [vmem:[%s4] sm:$0x1]
    %v118 = vlaneseq
    %v119 = vshrl.u32 %v118, 7
    %v120 = vsub.s32 0, %v119
    %v121 = vrot.slane %v116, %v120
    %v139 = vunpack.c.l.b16 %v100
    %v140 = vunpack.c.l.b16 %v101
    %v141 = vunpack.c.l.b16 %v102
    %v142 = vunpack.c.l.b16 %v103
    %v143 = vunpack.c.l.b16 %v104
    %v144 = vunpack.c.l.b16 %v105
    %v145 = vunpack.c.l.b16 %v106
    %v146 = vunpack.c.l.b16 %v107
    %v147 = vunpack.c.l.b16 %v108
    %v148 = vunpack.c.l.b16 %v109
    %v149 = vunpack.c.l.b16 %v110
    %v150 = vunpack.c.l.b16 %v111
    %v151 = vunpack.c.l.b16 %v112
    %v152 = vunpack.c.l.b16 %v113
    %v153 = vunpack.c.l.b16 %v114
    %v154 = vunpack.c.l.b16 %v115
    %v155 = vpack.c.b16 %v140, %v139
    %v156 = vpack.c.b16 %v142, %v141
    %v157 = vpack.c.b16 %v144, %v143
    %v158 = vpack.c.b16 %v146, %v145
    %v159 = vpack.c.b16 %v148, %v147
    %v160 = vpack.c.b16 %v150, %v149
    %v161 = vpack.c.b16 %v152, %v151
    %v162 = vpack.c.b16 %v154, %v153
    %171 = vmatprep.subr.bf16.mxu0 0
    %172 = vmatpush1.bf16.msra.mxu0 %v162
    %173 = vmatprep.subr.bf16.mxu0 0
    %174 = vmatpush1.bf16.msra.mxu0 %v161
    %175 = vmatprep.subr.bf16.mxu0 0
    %176 = vmatpush1.bf16.msra.mxu0 %v160
    %177 = vmatprep.subr.bf16.mxu0 0
    %178 = vmatpush1.bf16.msra.mxu0 %v159
    %179 = vmatprep.subr.bf16.mxu0 0
    %180 = vmatpush1.bf16.msra.mxu0 %v158
    %181 = vmatprep.subr.bf16.mxu0 0
    %182 = vmatpush1.bf16.msra.mxu0 %v157
    %183 = vmatprep.subr.bf16.mxu0 0
    %184 = vmatpush1.bf16.msra.mxu0 %v156
    %185 = vmatprep.subr.bf16.mxu0 0
    %186 = vmatpush1.bf16.msra.mxu0 %v155
    %187 = vmatprep.subr.bf16.mxu0 0
    %188 = vmatpush2.bf16.msra.mxu0 0
    %189 = vmatprep.subr.bf16.mxu0 0
    %190 = vmatpush2.bf16.msra.mxu0 0
    %191 = vmatprep.subr.bf16.mxu0 0
    %192 = vmatpush2.bf16.msra.mxu0 0
    %193 = vmatprep.subr.bf16.mxu0 0
    %194 = vmatpush2.bf16.msra.mxu0 0
    %195 = vmatprep.subr.bf16.mxu0 0
    %196 = vmatpush2.bf16.msra.mxu0 0
    %197 = vmatprep.subr.bf16.mxu0 0
    %198 = vmatpush2.bf16.msra.mxu0 0
    %199 = vmatprep.subr.bf16.mxu0 0
    %200 = vmatpush2.bf16.msra.mxu0 0
    %201 = vmatprep.subr.bf16.mxu0 0
    %202 = vmatpush2.bf16.msra.mxu0 0
    %203 = vmatprep.mubr.bf16.mxu0 0
    %204 = vmatmul.mubr.bf16.gmra.mxu0 %v99
    %v205 = vpop.f32.mrf.mxu0
    %v206 = vadd.f32 %v121, %v205
    %v207 = vpop.f32.mrf.mxu0
    %v208 = vpop.f32.mrf.mxu0
    %v209 = vpop.f32.mrf.mxu0
    %210 = vdwg.mxu0
    %v211 = vmul.f32 %v206, 0.01
    %v212 = vmax.f32 %v206, %v211
    %v213 = vpack.c.bf16 %v212, %v212
    %v214 = vld [vmem:[%s5] sm:$0xf]
    %v215 = vld [vmem:[%s5 + $0x4] sm:$0xf]
    %v216 = vld [vmem:[%s5 + $0x8] sm:$0xf]
    %v217 = vld [vmem:[%s5 + $0xc] sm:$0xf]
    %v218 = vld [vmem:[%s5 + $0x10] sm:$0xf]
    %v219 = vld [vmem:[%s5 + $0x14] sm:$0xf]
    %v220 = vld [vmem:[%s5 + $0x18] sm:$0xf]
    %v221 = vld [vmem:[%s5 + $0x1c] sm:$0xf]
    %v222 = vld [vmem:[%s6] sm:$0x1]
    %v224 = vlaneseq
    %v225 = vshrl.u32 %v224, 7
    %v226 = vsub.s32 0, %v225
    %v227 = vrot.slane %v222, %v226
    %v237 = vunpack.c.l.b16 %v214
    %v238 = vunpack.c.l.b16 %v215
    %v239 = vunpack.c.l.b16 %v216
    %v240 = vunpack.c.l.b16 %v217
    %v241 = vunpack.c.l.b16 %v218
    %v242 = vunpack.c.l.b16 %v219
    %v243 = vunpack.c.l.b16 %v220
    %v244 = vunpack.c.l.b16 %v221
    %v245 = vpack.c.b16 %v238, %v237
    %v246 = vpack.c.b16 %v240, %v239
    %v247 = vpack.c.b16 %v242, %v241
    %v248 = vpack.c.b16 %v244, %v243
    %vm253 = vcmask 523264
    %v255 = vsel %vm253, %v213, 0
    %257 = vmatprep.subr.bf16.mxu0 0
    %258 = vmatpush1.bf16.msra.mxu0 0
    %259 = vmatprep.subr.bf16.mxu0 0
    %260 = vmatpush1.bf16.msra.mxu0 0
    %261 = vmatprep.subr.bf16.mxu0 0
    %262 = vmatpush1.bf16.msra.mxu0 0
    %263 = vmatprep.subr.bf16.mxu0 0
    %264 = vmatpush1.bf16.msra.mxu0 0
    %265 = vmatprep.subr.bf16.mxu0 0
    %266 = vmatpush1.bf16.msra.mxu0 %v248
    %267 = vmatprep.subr.bf16.mxu0 0
    %268 = vmatpush1.bf16.msra.mxu0 %v247
    %269 = vmatprep.subr.bf16.mxu0 0
    %270 = vmatpush1.bf16.msra.mxu0 %v246
    %271 = vmatprep.subr.bf16.mxu0 0
    %272 = vmatpush1.bf16.msra.mxu0 %v245
    %273 = vmatprep.subr.bf16.mxu0 0
    %274 = vmatpush2.bf16.msra.mxu0 0
    %275 = vmatprep.subr.bf16.mxu0 0
    %276 = vmatpush2.bf16.msra.mxu0 0
    %277 = vmatprep.subr.bf16.mxu0 0
    %278 = vmatpush2.bf16.msra.mxu0 0
    %279 = vmatprep.subr.bf16.mxu0 0
    %280 = vmatpush2.bf16.msra.mxu0 0
    %281 = vmatprep.subr.bf16.mxu0 0
    %282 = vmatpush2.bf16.msra.mxu0 0
    %283 = vmatprep.subr.bf16.mxu0 0
    %284 = vmatpush2.bf16.msra.mxu0 0
    %285 = vmatprep.subr.bf16.mxu0 0
    %286 = vmatpush2.bf16.msra.mxu0 0
    %287 = vmatprep.subr.bf16.mxu0 0
    %288 = vmatpush2.bf16.msra.mxu0 0
    %289 = vmatprep.mubr.bf16.mxu0 0
    %290 = vmatmul.mubr.bf16.gmra.mxu0 %v255
    %v291 = vpop.f32.mrf.mxu0
    %v292 = vadd.f32 %v227, %v291
    %v293 = vpop.f32.mrf.mxu0
    %v294 = vpop.f32.mrf.mxu0
    %v295 = vpop.f32.mrf.mxu0
    %296 = vdwg.mxu0
    %v297 = vmul.f32 %v292, 0.01
    %v298 = vmax.f32 %v292, %v297
    %299 = vst [vmem:[#allocation2] sm:$0xff] %v298
    // Predicated region
    $region30: #{tpu_custom_call.1} parent=1 // pred_check
      _
    $region31: #{tpu_custom_call.1} parent=1 // pred_check_branch
      %301 = sbr.rel (0) target = $region33
    $region32: #{tpu_custom_call.1} parent=1 // pred_region
      %s303 = ssub.s32 128, 128
      %304 = vsyncadd [#allocation3], %s303
      %s306 = sshll.u32 [#allocation2], 4
      %s307 = int_to_ptr.vmem [resolvable:$true] %s306
      %309 = dma.vmem_to_hbm [thread:$0]  %s307, 128, %s7, [#allocation3]
    $region33: #{tpu_custom_call.1} parent=1 // pred_fallthru
      _
    // Predicated region
    $region34: #{tpu_custom_call.1} parent=1 // pred_check
      _
    $region35: #{tpu_custom_call.1} parent=1 // pred_check_branch
      %311 = sbr.rel (0) target = $region37
    $region36: #{tpu_custom_call.1} parent=1 // pred_region
      %312 = dma.done [#allocation3], 128
    $region37: #{tpu_custom_call.1} parent=1 // pred_fallthru
      _
    %313 = vsyncpa [#allocation3], 1

// kernel: tpu_custom_call.1
$region0: #{tpu_custom_call.1}
  #allocation0 [shape = 'u32[]', space=smem, size = 0x4, offset = 0x4, fixed_abs, tag = 'smem constant byte address 0x4 - core index']
  #allocation1 [shape = 'u32[144,128]{1,0:T(1,128)}', space=vmem, size = 0x12000, scoped, tag = 'internal scratch']
  %s0 = inlined_call_operand.vmem [shape: f32[8,32], index: 0, kind: input, shape index: {}]
  %s1 = inlined_call_operand.vmem [shape: bf16[32,128], index: 1, kind: input, shape index: {}]
  %s2 = inlined_call_operand.vmem [shape: f32[1,128], index: 2, kind: input, shape index: {}]
  %s3 = inlined_call_operand.vmem [shape: bf16[128,64], index: 3, kind: input, shape index: {}]
  %s4 = inlined_call_operand.vmem [shape: f32[1,64], index: 4, kind: input, shape index: {}]
  %s5 = inlined_call_operand.vmem [shape: bf16[64,128], index: 5, kind: input, shape index: {}]
  %s6 = inlined_call_operand.vmem [shape: f32[1,128], index: 6, kind: input, shape index: {}]
  %s7 = inlined_call_operand.hbm [shape: f32[8,128], index: 7, kind: output, shape index: {}]
  %s8 = sld [smem:[#allocation0]]
  $region38: #{tpu_custom_call.1} parent=0
    _
  %s10 = ssub.s32 1, %s8
  %s11 = scalar_select 0, %s10, %s8
  $region1: #{tpu_custom_call.1} parent=0
    #allocation2 [shape = 'u8[4096]{0}', space=vmem, size = 0x1000, scoped, tag = 'output window, operand 0, single buffered']
    #allocation3 [shape = 's32[1]{0}', space=sflag, size = 0x4, scoped, tag = 'scoped memory for tpu_custom_call.1']
    %12 = vsyncpa [#allocation3], 0
    // Predicated region
    $region2: #{tpu_custom_call.1} parent=1 // pred_check
      _
    $region3: #{tpu_custom_call.1} parent=1 // pred_check_branch
      %14 = sbr.rel (0) target = $region5
    $region4: #{tpu_custom_call.1} parent=1 // pred_region
      _
    $region5: #{tpu_custom_call.1} parent=1 // pred_fallthru
      _
    // Predicated region
    $region6: #{tpu_custom_call.1} parent=1 // pred_check
      _
    $region7: #{tpu_custom_call.1} parent=1 // pred_check_branch
      %16 = sbr.rel (0) target = $region9
    $region8: #{tpu_custom_call.1} parent=1 // pred_region
      _
    $region9: #{tpu_custom_call.1} parent=1 // pred_fallthru
      _
    // Predicated region
    $region10: #{tpu_custom_call.1} parent=1 // pred_check
      _
    $region11: #{tpu_custom_call.1} parent=1 // pred_check_branch
      %18 = sbr.rel (0) target = $region13
    $region12: #{tpu_custom_call.1} parent=1 // pred_region
      _
    $region13: #{tpu_custom_call.1} parent=1 // pred_fallthru
      _
    // Predicated region
    $region14: #{tpu_custom_call.1} parent=1 // pred_check
      _
    $region15: #{tpu_custom_call.1} parent=1 // pred_check_branch
      %20 = sbr.rel (0) target = $region17
    $region16: #{tpu_custom_call.1} parent=1 // pred_region
      _
    $region17: #{tpu_custom_call.1} parent=1 // pred_fallthru
      _
    // Predicated region
    $region18: #{tpu_custom_call.1} parent=1 // pred_check
      _
    $region19: #{tpu_custom_call.1} parent=1 // pred_check_branch
      %22 = sbr.rel (0) target = $region21
    $region20: #{tpu_custom_call.1} parent=1 // pred_region
      _
    $region21: #{tpu_custom_call.1} parent=1 // pred_fallthru
      _
    // Predicated region
    $region22: #{tpu_custom_call.1} parent=1 // pred_check
      _
    $region23: #{tpu_custom_call.1} parent=1 // pred_check_branch
      %24 = sbr.rel (0) target = $region25
    $region24: #{tpu_custom_call.1} parent=1 // pred_region
      _
    $region25: #{tpu_custom_call.1} parent=1 // pred_fallthru
      _
    // Predicated region
    $region26: #{tpu_custom_call.1} parent=1 // pred_check
      _
    $region27: #{tpu_custom_call.1} parent=1 // pred_check_branch
      %26 = sbr.rel (0) target = $region29
    $region28: #{tpu_custom_call.1} parent=1 // pred_region
      _
    $region29: #{tpu_custom_call.1} parent=1 // pred_fallthru
      _
    %v28 = vld [vmem:[%s0] sm:$0xff]
    %v29 = vpack.c.bf16 %v28, %v28
    %v30 = vld [vmem:[%s1] sm:$0xf]
    %v31 = vld [vmem:[%s1 + $0x4] sm:$0xf]
    %v32 = vld [vmem:[%s1 + $0x8] sm:$0xf]
    %v33 = vld [vmem:[%s1 + $0xc] sm:$0xf]
    %v34 = vld [vmem:[%s2] sm:$0x1]
    %v36 = vlaneseq
    %v37 = vshrl.u32 %v36, 7
    %v38 = vsub.s32 0, %v37
    %v39 = vrot.slane %v34, %v38
    %v45 = vunpack.c.l.b16 %v30
    %v46 = vunpack.c.l.b16 %v31
    %v47 = vunpack.c.l.b16 %v32
    %v48 = vunpack.c.l.b16 %v33
    %v49 = vpack.c.b16 %v46, %v45
    %v50 = vpack.c.b16 %v48, %v47
    %vm53 = vcmask 261120
    %v55 = vsel %vm53, %v29, 0
    %57 = vmatprep.subr.bf16.mxu0 0
    %58 = vmatpush1.bf16.msra.mxu0 0
    %59 = vmatprep.subr.bf16.mxu0 0
    %60 = vmatpush1.bf16.msra.mxu0 0
    %61 = vmatprep.subr.bf16.mxu0 0
    %62 = vmatpush1.bf16.msra.mxu0 0
    %63 = vmatprep.subr.bf16.mxu0 0
    %64 = vmatpush1.bf16.msra.mxu0 0
    %65 = vmatprep.subr.bf16.mxu0 0
    %66 = vmatpush1.bf16.msra.mxu0 0
    %67 = vmatprep.subr.bf16.mxu0 0
    %68 = vmatpush1.bf16.msra.mxu0 0
    %69 = vmatprep.subr.bf16.mxu0 0
    %70 = vmatpush1.bf16.msra.mxu0 %v50
    %71 = vmatprep.subr.bf16.mxu0 0
    %72 = vmatpush1.bf16.msra.mxu0 %v49
    %73 = vmatprep.subr.bf16.mxu0 0
    %74 = vmatpush2.bf16.msra.mxu0 0
    %75 = vmatprep.subr.bf16.mxu0 0
    %76 = vmatpush2.bf16.msra.mxu0 0
    %77 = vmatprep.subr.bf16.mxu0 0
    %78 = vmatpush2.bf16.msra.mxu0 0
    %79 = vmatprep.subr.bf16.mxu0 0
    %80 = vmatpush2.bf16.msra.mxu0 0
    %81 = vmatprep.subr.bf16.mxu0 0
    %82 = vmatpush2.bf16.msra.mxu0 0
    %83 = vmatprep.subr.bf16.mxu0 0
    %84 = vmatpush2.bf16.msra.mxu0 0
    %85 = vmatprep.subr.bf16.mxu0 0
    %86 = vmatpush2.bf16.msra.mxu0 0
    %87 = vmatprep.subr.bf16.mxu0 0
    %88 = vmatpush2.bf16.msra.mxu0 0
    %89 = vmatprep.mubr.bf16.mxu0 0
    %90 = vmatmul.mubr.bf16.gmra.mxu0 %v55
    %v91 = vpop.f32.mrf.mxu0
    %v92 = vadd.f32 %v39, %v91
    %v93 = vpop.f32.mrf.mxu0
    %v94 = vpop.f32.mrf.mxu0
    %v95 = vpop.f32.mrf.mxu0
    %96 = vdwg.mxu0
    %v97 = vmul.f32 %v92, 0.01
    %v98 = vmax.f32 %v92, %v97
    %v99 = vpack.c.bf16 %v98, %v98
    %v100 = vld [vmem:[%s3] sm:$0xf]
    %v101 = vld [vmem:[%s3 + $0x4] sm:$0xf]
    %v102 = vld [vmem:[%s3 + $0x8] sm:$0xf]
    %v103 = vld [vmem:[%s3 + $0xc] sm:$0xf]
    %v104 = vld [vmem:[%s3 + $0x10] sm:$0xf]
    %v105 = vld [vmem:[%s3 + $0x14] sm:$0xf]
    %v106 = vld [vmem:[%s3 + $0x18] sm:$0xf]
    %v107 = vld [vmem:[%s3 + $0x1c] sm:$0xf]
    %v108 = vld [vmem:[%s3 + $0x20] sm:$0xf]
    %v109 = vld [vmem:[%s3 + $0x24] sm:$0xf]
    %v110 = vld [vmem:[%s3 + $0x28] sm:$0xf]
    %v111 = vld [vmem:[%s3 + $0x2c] sm:$0xf]
    %v112 = vld [vmem:[%s3 + $0x30] sm:$0xf]
    %v113 = vld [vmem:[%s3 + $0x34] sm:$0xf]
    %v114 = vld [vmem:[%s3 + $0x38] sm:$0xf]
    %v115 = vld [vmem:[%s3 + $0x3c] sm:$0xf]
    %v116 = vld [vmem:[%s4] sm:$0x1]
    %v118 = vlaneseq
    %v119 = vshrl.u32 %v118, 7
    %v120 = vsub.s32 0, %v119
    %v121 = vrot.slane %v116, %v120
    %v139 = vunpack.c.l.b16 %v100
    %v140 = vunpack.c.l.b16 %v101
    %v141 = vunpack.c.l.b16 %v102
    %v142 = vunpack.c.l.b16 %v103
    %v143 = vunpack.c.l.b16 %v104
    %v144 = vunpack.c.l.b16 %v105
    %v145 = vunpack.c.l.b16 %v106
    %v146 = vunpack.c.l.b16 %v107
    %v147 = vunpack.c.l.b16 %v108
    %v148 = vunpack.c.l.b16 %v109
    %v149 = vunpack.c.l.b16 %v110
    %v150 = vunpack.c.l.b16 %v111
    %v151 = vunpack.c.l.b16 %v112
    %v152 = vunpack.c.l.b16 %v113
    %v153 = vunpack.c.l.b16 %v114
    %v154 = vunpack.c.l.b16 %v115
    %v155 = vpack.c.b16 %v140, %v139
    %v156 = vpack.c.b16 %v142, %v141
    %v157 = vpack.c.b16 %v144, %v143
    %v158 = vpack.c.b16 %v146, %v145
    %v159 = vpack.c.b16 %v148, %v147
    %v160 = vpack.c.b16 %v150, %v149
    %v161 = vpack.c.b16 %v152, %v151
    %v162 = vpack.c.b16 %v154, %v153
    %171 = vmatprep.subr.bf16.mxu0 0
    %172 = vmatpush1.bf16.msra.mxu0 %v162
    %173 = vmatprep.subr.bf16.mxu0 0
    %174 = vmatpush1.bf16.msra.mxu0 %v161
    %175 = vmatprep.subr.bf16.mxu0 0
    %176 = vmatpush1.bf16.msra.mxu0 %v160
    %177 = vmatprep.subr.bf16.mxu0 0
    %178 = vmatpush1.bf16.msra.mxu0 %v159
    %179 = vmatprep.subr.bf16.mxu0 0
    %180 = vmatpush1.bf16.msra.mxu0 %v158
    %181 = vmatprep.subr.bf16.mxu0 0
    %182 = vmatpush1.bf16.msra.mxu0 %v157
    %183 = vmatprep.subr.bf16.mxu0 0
    %184 = vmatpush1.bf16.msra.mxu0 %v156
    %185 = vmatprep.subr.bf16.mxu0 0
    %186 = vmatpush1.bf16.msra.mxu0 %v155
    %187 = vmatprep.subr.bf16.mxu0 0
    %188 = vmatpush2.bf16.msra.mxu0 0
    %189 = vmatprep.subr.bf16.mxu0 0
    %190 = vmatpush2.bf16.msra.mxu0 0
    %191 = vmatprep.subr.bf16.mxu0 0
    %192 = vmatpush2.bf16.msra.mxu0 0
    %193 = vmatprep.subr.bf16.mxu0 0
    %194 = vmatpush2.bf16.msra.mxu0 0
    %195 = vmatprep.subr.bf16.mxu0 0
    %196 = vmatpush2.bf16.msra.mxu0 0
    %197 = vmatprep.subr.bf16.mxu0 0
    %198 = vmatpush2.bf16.msra.mxu0 0
    %199 = vmatprep.subr.bf16.mxu0 0
    %200 = vmatpush2.bf16.msra.mxu0 0
    %201 = vmatprep.subr.bf16.mxu0 0
    %202 = vmatpush2.bf16.msra.mxu0 0
    %203 = vmatprep.mubr.bf16.mxu0 0
    %204 = vmatmul.mubr.bf16.gmra.mxu0 %v99
    %v205 = vpop.f32.mrf.mxu0
    %v206 = vadd.f32 %v121, %v205
    %v207 = vpop.f32.mrf.mxu0
    %v208 = vpop.f32.mrf.mxu0
    %v209 = vpop.f32.mrf.mxu0
    %210 = vdwg.mxu0
    %v211 = vmul.f32 %v206, 0.01
    %v212 = vmax.f32 %v206, %v211
    %v213 = vpack.c.bf16 %v212, %v212
    %v214 = vld [vmem:[%s5] sm:$0xf]
    %v215 = vld [vmem:[%s5 + $0x4] sm:$0xf]
    %v216 = vld [vmem:[%s5 + $0x8] sm:$0xf]
    %v217 = vld [vmem:[%s5 + $0xc] sm:$0xf]
    %v218 = vld [vmem:[%s5 + $0x10] sm:$0xf]
    %v219 = vld [vmem:[%s5 + $0x14] sm:$0xf]
    %v220 = vld [vmem:[%s5 + $0x18] sm:$0xf]
    %v221 = vld [vmem:[%s5 + $0x1c] sm:$0xf]
    %v222 = vld [vmem:[%s6] sm:$0x1]
    %v224 = vlaneseq
    %v225 = vshrl.u32 %v224, 7
    %v226 = vsub.s32 0, %v225
    %v227 = vrot.slane %v222, %v226
    %v237 = vunpack.c.l.b16 %v214
    %v238 = vunpack.c.l.b16 %v215
    %v239 = vunpack.c.l.b16 %v216
    %v240 = vunpack.c.l.b16 %v217
    %v241 = vunpack.c.l.b16 %v218
    %v242 = vunpack.c.l.b16 %v219
    %v243 = vunpack.c.l.b16 %v220
    %v244 = vunpack.c.l.b16 %v221
    %v245 = vpack.c.b16 %v238, %v237
    %v246 = vpack.c.b16 %v240, %v239
    %v247 = vpack.c.b16 %v242, %v241
    %v248 = vpack.c.b16 %v244, %v243
    %vm253 = vcmask 523264
    %v255 = vsel %vm253, %v213, 0
    %257 = vmatprep.subr.bf16.mxu0 0
    %258 = vmatpush1.bf16.msra.mxu0 0
    %259 = vmatprep.subr.bf16.mxu0 0
    %260 = vmatpush1.bf16.msra.mxu0 0
    %261 = vmatprep.subr.bf16.mxu0 0
    %262 = vmatpush1.bf16.msra.mxu0 0
    %263 = vmatprep.subr.bf16.mxu0 0
    %264 = vmatpush1.bf16.msra.mxu0 0
    %265 = vmatprep.subr.bf16.mxu0 0
    %266 = vmatpush1.bf16.msra.mxu0 %v248
    %267 = vmatprep.subr.bf16.mxu0 0
    %268 = vmatpush1.bf16.msra.mxu0 %v247
    %269 = vmatprep.subr.bf16.mxu0 0
    %270 = vmatpush1.bf16.msra.mxu0 %v246
    %271 = vmatprep.subr.bf16.mxu0 0
    %272 = vmatpush1.bf16.msra.mxu0 %v245
    %273 = vmatprep.subr.bf16.mxu0 0
    %274 = vmatpush2.bf16.msra.mxu0 0
    %275 = vmatprep.subr.bf16.mxu0 0
    %276 = vmatpush2.bf16.msra.mxu0 0
    %277 = vmatprep.subr.bf16.mxu0 0
    %278 = vmatpush2.bf16.msra.mxu0 0
    %279 = vmatprep.subr.bf16.mxu0 0
    %280 = vmatpush2.bf16.msra.mxu0 0
    %281 = vmatprep.subr.bf16.mxu0 0
    %282 = vmatpush2.bf16.msra.mxu0 0
    %283 = vmatprep.subr.bf16.mxu0 0
    %284 = vmatpush2.bf16.msra.mxu0 0
    %285 = vmatprep.subr.bf16.mxu0 0
    %286 = vmatpush2.bf16.msra.mxu0 0
    %287 = vmatprep.subr.bf16.mxu0 0
    %288 = vmatpush2.bf16.msra.mxu0 0
    %289 = vmatprep.mubr.bf16.mxu0 0
    %290 = vmatmul.mubr.bf16.gmra.mxu0 %v255
    %v291 = vpop.f32.mrf.mxu0
    %v292 = vadd.f32 %v227, %v291
    %v293 = vpop.f32.mrf.mxu0
    %v294 = vpop.f32.mrf.mxu0
    %v295 = vpop.f32.mrf.mxu0
    %296 = vdwg.mxu0
    %v297 = vmul.f32 %v292, 0.01
    %v298 = vmax.f32 %v292, %v297
    %299 = vst [vmem:[#allocation2] sm:$0xff] %v298
    // Predicated region
    $region30: #{tpu_custom_call.1} parent=1 // pred_check
      _
    $region31: #{tpu_custom_call.1} parent=1 // pred_check_branch
      %301 = sbr.rel (0) target = $region33
    $region32: #{tpu_custom_call.1} parent=1 // pred_region
      %s303 = ssub.s32 128, 128
      %304 = vsyncadd [#allocation3], %s303
      %s306 = sshll.u32 [#allocation2], 4
      %s307 = int_to_ptr.vmem [resolvable:$true] %s306
      %309 = dma.vmem_to_hbm [thread:$0]  %s307, 128, %s7, [#allocation3]
    $region33: #{tpu_custom_call.1} parent=1 // pred_fallthru
      _
    // Predicated region
    $region34: #{tpu_custom_call.1} parent=1 // pred_check
      _
    $region35: #{tpu_custom_call.1} parent=1 // pred_check_branch
      %311 = sbr.rel (0) target = $region37
    $region36: #{tpu_custom_call.1} parent=1 // pred_region
      %312 = dma.done [#allocation3], 128
    $region37: #{tpu_custom_call.1} parent=1 // pred_fallthru
      _
    %313 = vsyncpa [#allocation3], 1

</llo_original>
